<compile_context>
chip_gen: v7x
topology: tpu7x:2x2x1
jax: 0.10.0
libtpu: 0.0.40
codegen_flags: <defaults>
</compile_context>

<pallas_src>
import math
import functools

import jax
import jax.numpy as jnp
from jax.experimental import pallas as pl
from jax.experimental.pallas import tpu as pltpu


def build_pe_buffer(d_model: int, max_len: int = 5000, dtype=jnp.float32) -> jnp.ndarray:
    """Sinusoidal PE buffer, identical to the torch __init__ (shape (max_len, 1, d_model))."""
    position = jnp.arange(0, max_len, dtype=jnp.float32)[:, None]
    div_term = jnp.exp(jnp.arange(0, d_model, 2, dtype=jnp.float32)
                       * (-math.log(10000.0) / d_model))
    pe = jnp.zeros((max_len, d_model), dtype=jnp.float32)
    pe = pe.at[:, 0::2].set(jnp.sin(position * div_term))
    pe = pe.at[:, 1::2].set(jnp.cos(position * div_term))
    return pe[:, None, :].astype(dtype)


def _round_up(v: int, m: int) -> int:
    return (v + m - 1) // m * m


def _choose_tiles(S: int, B: int, D: int, itemsize: int, target_bytes: int):
    """Pick (ts, tb) for (ts, tb, D) blocks.  Pass B=1 for the 2-D (S, B*D) layout."""
    pack = 8 * max(1, 4 // max(itemsize, 1))        # sublane packing: f32 8, bf16 16, int8 32
    elem = D * itemsize
    tb = B
    # Batch split when even a minimal (pack-row, full-B) slab exceeds the budget (v7x VMEM).
    if B >= 16 and pack * B * elem > target_bytes:
        tb = min(B, max(8, (target_bytes // (pack * elem)) // 8 * 8))
    # TODO(synk): if a (pack, 8, D) slab still exceeds the budget (huge D), a third grid
    # axis over D in multiples of 128 lanes would be needed.
    row = tb * elem
    if S * row <= target_bytes:
        ts = S
    else:
        ts = min(S, max(pack, (target_bytes // max(row, 1)) // pack * pack))
    nb = (B + tb - 1) // tb
    # Guarantee >=2 grid steps when possible so both v7x TensorCores get work.
    if ts >= S and nb == 1 and S >= 2 * pack:
        ts = _round_up((S + 1) // 2, pack)
    return ts, tb


def _vmem_bytes(ts: int, tb: int, D: int, x_item: int, pe_item: int, use_dropout: bool) -> int:
    """Real per-step VMEM: double-buffered x/out/pe/bits streams + kernel temps."""
    xblk = ts * tb * D * x_item
    peblk = ts * D * pe_item
    rblk = ts * tb * D * 4 if use_dropout else 0
    return 2 * (2 * xblk + peblk + rblk) + 3 * max(xblk, rblk)


def _make_kernel(use_dropout: bool, threshold: int, scale: float, bcast_2d=None):
    """bcast_2d=None -> 3-D blocks (ts,tb,D)+(ts,1,D); bcast_2d=(B,D) -> 2-D (ts,B*D) blocks."""

    def add_pe(x, pe):
        if bcast_2d is None:
            return x + pe                       # sublane broadcast over batch dim (VPU, free-ish)
        b, d = bcast_2d
        ts = x.shape[0]
        pe_row = jnp.broadcast_to(pe[:, None, :], (ts, b, d)).reshape(ts, b * d)
        return x + pe_row

    if use_dropout:
        def kernel(x_ref, pe_ref, r_ref, o_ref):
            y = add_pe(x_ref[...], pe_ref[...])
            keep = r_ref[...] >= jnp.int32(threshold)      # P(keep) = 1 - p
            o_ref[...] = jnp.where(keep, y * scale, jnp.zeros_like(y)).astype(o_ref.dtype)
        return kernel

    def kernel(x_ref, pe_ref, o_ref):
        o_ref[...] = add_pe(x_ref[...], pe_ref[...]).astype(o_ref.dtype)
    return kernel


@functools.partial(jax.jit, static_argnames=("dropout_p", "training", "min_pallas_bytes"))
def positional_encoding_forward(x, pe, seed, *, dropout_p: float = 0.1,
                                training: bool = False,
                                min_pallas_bytes: int = 1 << 20):
    """x: (S, B, D); pe: (max_len, 1, D); seed: (1,) int32."""
    S, B, D = x.shape
    use_dropout = bool(training) and float(dropout_p) > 0.0

    # Pre-cast pe to x's dtype once (no per-element cast in the kernel, halves pe DMA for bf16).
    # TODO(synk): PyTorch would promote bf16 x + fp32 pe to fp32; we keep x.dtype for bandwidth.
    pe_c = pe if pe.dtype == x.dtype else pe.astype(x.dtype)

    threshold = 0
    scale = 1.0
    rbits = None
    if use_dropout:
        # Random bits generated OUTSIDE the kernel (portable: no pltpu.prng_seed), 31-bit int32.
        # TODO(synk): this RNG stream cannot bit-match torch's dropout mask.
        threshold = min(int(round(float(dropout_p) * (2.0 ** 31))), 2 ** 31 - 1)
        scale = 1.0 / (1.0 - float(dropout_p))
        key = jax.random.fold_in(jax.random.PRNGKey(0), seed[0])
        bits = jax.random.bits(key, (S, B, D), dtype=jnp.uint32)
        rbits = jax.lax.shift_right_logical(bits, jnp.uint32(1)).astype(jnp.int32)

    # Tiny tensors: skip the standalone kernel so XLA can fuse the add+mask into neighbours.
    if x.size * x.dtype.itemsize < min_pallas_bytes:
        y = x + pe_c[:S]
        if use_dropout:
            keep = rbits >= threshold
            y = jnp.where(keep, y * scale, jnp.zeros_like(y))
        return y.astype(x.dtype)

    itemsize = x.dtype.itemsize
    target_bytes = 4 << 20                      # ~4 MiB x blocks (per-step overhead < 5%)
    pack = 8 * max(1, 4 // max(itemsize, 1))

    # Lane-dense 2-D layout only when it makes the store lane dim a multiple of 128
    # (and a minimal full-row slab still fits the tile budget); otherwise 3-D blocks
    # with an implicit batch broadcast of pe.
    use_2d = (D % 128 != 0) and ((B * D) % 128 == 0) and (pack * B * D * itemsize <= target_bytes)

    if use_2d:
        ts, _ = _choose_tiles(S, 1, B * D, itemsize, target_bytes)
        grid = (pl.cdiv(S, ts),)
        x_in = x.reshape(S, B * D)              # free reshape of contiguous (S,B,D)
        pe_in = pe_c.reshape(pe_c.shape[0], D)  # full buffer; BlockSpec windows first S rows
        in_specs = [pl.BlockSpec((ts, B * D), lambda i: (i, 0)),
                    pl.BlockSpec((ts, D), lambda i: (i, 0))]
        args = [x_in, pe_in]
        if use_dropout:
            in_specs.append(pl.BlockSpec((ts, B * D), lambda i: (i, 0)))
            args.append(rbits.reshape(S, B * D))
        out_specs = pl.BlockSpec((ts, B * D), lambda i: (i, 0))
        out_shape = jax.ShapeDtypeStruct((S, B * D), x.dtype)
        kernel = _make_kernel(use_dropout, threshold, scale, bcast_2d=(B, D))
        vmem_est = _vmem_bytes(ts, 1, B * D, itemsize, pe_c.dtype.itemsize, use_dropout)
    else:
        ts, tb = _choose_tiles(S, B, D, itemsize, target_bytes)
        grid = (pl.cdiv(S, ts), pl.cdiv(B, tb))
        in_specs = [pl.BlockSpec((ts, tb, D), lambda i, j: (i, j, 0)),
                    pl.BlockSpec((ts, 1, D), lambda i, j: (i, 0, 0))]
        args = [x, pe_c]                        # full pe buffer; index_map windows rows < S
        if use_dropout:
            in_specs.append(pl.BlockSpec((ts, tb, D), lambda i, j: (i, j, 0)))
            args.append(rbits)
        out_specs = pl.BlockSpec((ts, tb, D), lambda i, j: (i, j, 0))
        out_shape = jax.ShapeDtypeStruct((S, B, D), x.dtype)
        kernel = _make_kernel(use_dropout, threshold, scale, bcast_2d=None)
        vmem_est = _vmem_bytes(ts, tb, D, itemsize, pe_c.dtype.itemsize, use_dropout)

    compiler_params = pltpu.CompilerParams(
        dimension_semantics=("parallel",) * len(grid),        # megacore sharding on v7x
        vmem_limit_bytes=int(min(max(vmem_est + (4 << 20), 32 << 20), 48 << 20)))

    out = pl.pallas_call(
        kernel,
        out_shape=out_shape,
        grid_spec=pl.GridSpec(grid=grid, in_specs=in_specs, out_specs=out_specs),
        compiler_params=compiler_params,
    )(*args)
    return out.reshape(S, B, D)


if __name__ == "__main__":
    # Small shapes consistent with the module: (seq=8, batch=2, d_model=32).
    S, B, D = 8, 2, 32
    MAX_LEN = 5000

    key = jax.random.PRNGKey(0)
    x = jax.random.normal(key, (S, B, D), dtype=jnp.float32)
    pe = build_pe_buffer(D, MAX_LEN, dtype=jnp.float32)
    seed = jnp.array([0], dtype=jnp.int32)

    ref = x + pe[:S]

    # Eval-mode forward through the Pallas kernel (min_pallas_bytes=0 forces the kernel path).
    out = positional_encoding_forward(x, pe, seed, dropout_p=0.1, training=False,
                                      min_pallas_bytes=0)
    out = jax.block_until_ready(out)
    assert out.shape == (S, B, D) and out.dtype == jnp.float32
    assert jnp.allclose(out, ref, atol=1e-6, rtol=1e-6)

    # Slightly longer sequence -> exercises a multi-step (>=2) parallel grid.
    S2 = 64
    x2 = jax.random.normal(jax.random.PRNGKey(1), (S2, B, D), dtype=jnp.float32)
    ref2 = x2 + pe[:S2]
    out2 = positional_encoding_forward(x2, pe, seed, dropout_p=0.1, training=False,
                                       min_pallas_bytes=0)
    out2 = jax.block_until_ready(out2)
    assert jnp.allclose(out2, ref2, atol=1e-6, rtol=1e-6)

    # Training-mode: every element is either dropped (0) or scaled by 1/(1-p), and the
    # kernel path mask matches the small-input fallback (same precomputed bits).
    p = 0.25
    out_tr = positional_encoding_forward(x, pe, seed, dropout_p=p, training=True,
                                         min_pallas_bytes=0)
    out_tr = jax.block_until_ready(out_tr)
    kept = ref * (1.0 / (1.0 - p))
    ok = jnp.isclose(out_tr, kept, rtol=1e-5, atol=1e-5) | (out_tr == 0.0)
    assert bool(jnp.all(ok))
    assert bool(jnp.any(out_tr == 0.0)) and bool(jnp.any(out_tr != 0.0))

    out_tr_fb = positional_encoding_forward(x, pe, seed, dropout_p=p, training=True,
                                            min_pallas_bytes=1 << 30)   # fallback path
    out_tr_fb = jax.block_until_ready(out_tr_fb)
    assert jnp.allclose(out_tr, out_tr_fb, atol=1e-5, rtol=1e-5)

    print("KERNEL_OK")
</pallas_src>

<mosaic_0001>
module attributes {stable_mosaic.version = 11 : i64} {
  func.func @kernel(%arg0: i32, %arg1: i32, %arg2: memref<8x2x32xf32, #tpu.memory_space<vmem>>, %arg3: memref<8x1x32xf32, #tpu.memory_space<vmem>>, %arg4: memref<8x2x32xf32, #tpu.memory_space<vmem>>) attributes {dimension_semantics = [#tpu.dimension_semantics<parallel>, #tpu.dimension_semantics<parallel>], iteration_bounds = array<i64: 1, 1>, scalar_prefetch = 0 : i64, scratch_operands = 0 : i64, tpu.core_type = #tpu.core_type<tc>, window_params = [{transform_indices = @transform_0, window_bounds = array<i64: 8, 2, 32>}, {transform_indices = @transform_1, window_bounds = array<i64: 8, 1, 32>}, {transform_indices = @transform_2, window_bounds = array<i64: 8, 2, 32>}]} {
    %c0 = arith.constant 0 : index
    %c0_0 = arith.constant 0 : index
    %c0_1 = arith.constant 0 : index
    %0 = vector.load %arg2[%c0, %c0_0, %c0_1] : memref<8x2x32xf32, #tpu.memory_space<vmem>>, vector<8x2x32xf32>
    %c0_2 = arith.constant 0 : index
    %c0_3 = arith.constant 0 : index
    %c0_4 = arith.constant 0 : index
    %1 = vector.load %arg3[%c0_2, %c0_3, %c0_4] : memref<8x1x32xf32, #tpu.memory_space<vmem>>, vector<8x1x32xf32>
    %2 = vector.broadcast %1 : vector<8x1x32xf32> to vector<8x2x32xf32>
    %3 = arith.addf %0, %2 : vector<8x2x32xf32>
    %c0_5 = arith.constant 0 : index
    %c0_6 = arith.constant 0 : index
    %c0_7 = arith.constant 0 : index
    %4 = vector.load %arg4[%c0_5, %c0_6, %c0_7] : memref<8x2x32xf32, #tpu.memory_space<vmem>>, vector<8x2x32xf32>
    tpu.vector_store %arg4[%c0_5, %c0_6, %c0_7], %3 {strides = array<i32>} : memref<8x2x32xf32, #tpu.memory_space<vmem>>, vector<8x2x32xf32>,
    return
  }
  func.func @transform_0(%arg0: i32, %arg1: i32) -> (i32, i32, i32) {
    %c0_i32 = arith.constant 0 : i32
    %c0_i32_0 = arith.constant 0 : i32
    return %arg0, %arg1, %c0_i32 : i32, i32, i32
  }
  func.func @transform_1(%arg0: i32, %arg1: i32) -> (i32, i32, i32) {
    %c0_i32 = arith.constant 0 : i32
    %c0_i32_0 = arith.constant 0 : i32
    %c0_i32_1 = arith.constant 0 : i32
    return %arg0, %c0_i32, %c0_i32_0 : i32, i32, i32
  }
  func.func @transform_2(%arg0: i32, %arg1: i32) -> (i32, i32, i32) {
    %c0_i32 = arith.constant 0 : i32
    %c0_i32_0 = arith.constant 0 : i32
    return %arg0, %arg1, %c0_i32 : i32, i32, i32
  }
}

</mosaic_0001>

<llo_original>
// kernel: positional_encoding_forward.1
$region0: #{positional_encoding_forward.1}
  #allocation0 [shape = 'u32[]', space=smem, size = 0x4, offset = 0x4, fixed_abs, tag = 'smem constant byte address 0x4 - core index']
  #allocation1 [shape = 'u32[144,128]{1,0:T(1,128)}', space=vmem, size = 0x12000, scoped, tag = 'internal scratch']
  %s0 = inlined_call_operand.vmem [shape: f32[8,2,32], index: 0, kind: input, shape index: {}]
  %s1 = inlined_call_operand.vmem [shape: f32[5000,1,32], index: 1, kind: input, shape index: {}]
  %s2 = inlined_call_operand.hbm [shape: f32[8,2,32], index: 2, kind: output, shape index: {}]
  %s3 = sld [smem:[#allocation0]]
  $region18: #{positional_encoding_forward.1} parent=0
    _
  %s5 = ssub.s32 1, %s3
  %s6 = scalar_select 0, %s5, %s3
  $region1: #{positional_encoding_forward.1} parent=0
    #allocation2 [shape = 'u8[8192]{0}', space=vmem, size = 0x2000, scoped, tag = 'output window, operand 0, single buffered']
    #allocation3 [shape = 's32[1]{0}', space=sflag, size = 0x4, scoped, tag = 'scoped memory for positional_encoding_forward.1']
    %7 = vsyncpa [#allocation3], 0
    // Predicated region
    $region2: #{positional_encoding_forward.1} parent=1 // pred_check
      _
    $region3: #{positional_encoding_forward.1} parent=1 // pred_check_branch
      %9 = sbr.rel (0) target = $region5
    $region4: #{positional_encoding_forward.1} parent=1 // pred_region
      _
    $region5: #{positional_encoding_forward.1} parent=1 // pred_fallthru
      _
    // Predicated region
    $region6: #{positional_encoding_forward.1} parent=1 // pred_check
      _
    $region7: #{positional_encoding_forward.1} parent=1 // pred_check_branch
      %11 = sbr.rel (0) target = $region9
    $region8: #{positional_encoding_forward.1} parent=1 // pred_region
      _
    $region9: #{positional_encoding_forward.1} parent=1 // pred_fallthru
      _
    %v12 = vld [vmem:[%s0] sm:$0x3]
    %v13 = vld [vmem:[%s0 + $0x2] sm:$0x3]
    %v14 = vld [vmem:[%s0 + $0x4] sm:$0x3]
    %v15 = vld [vmem:[%s0 + $0x6] sm:$0x3]
    %v16 = vld [vmem:[%s0 + $0x8] sm:$0x3]
    %v17 = vld [vmem:[%s0 + $0xa] sm:$0x3]
    %v18 = vld [vmem:[%s0 + $0xc] sm:$0x3]
    %v19 = vld [vmem:[%s0 + $0xe] sm:$0x3]
    %v20 = vld [vmem:[%s1] sm:$0x1]
    %v21 = vld [vmem:[%s1 + $0x1] sm:$0x1]
    %v22 = vld [vmem:[%s1 + $0x2] sm:$0x1]
    %v23 = vld [vmem:[%s1 + $0x3] sm:$0x1]
    %v24 = vld [vmem:[%s1 + $0x4] sm:$0x1]
    %v25 = vld [vmem:[%s1 + $0x5] sm:$0x1]
    %v26 = vld [vmem:[%s1 + $0x6] sm:$0x1]
    %v27 = vld [vmem:[%s1 + $0x7] sm:$0x1]
    %v36 = vlaneseq
    %v37 = vshrl.u32 %v36, 7
    %v38 = vsub.s32 0, %v37
    %v39 = vrot.slane %v20, %v38
    %v40 = vlaneseq
    %v41 = vshrl.u32 %v40, 7
    %v42 = vsub.s32 0, %v41
    %v43 = vrot.slane %v21, %v42
    %v44 = vlaneseq
    %v45 = vshrl.u32 %v44, 7
    %v46 = vsub.s32 0, %v45
    %v47 = vrot.slane %v22, %v46
    %v48 = vlaneseq
    %v49 = vshrl.u32 %v48, 7
    %v50 = vsub.s32 0, %v49
    %v51 = vrot.slane %v23, %v50
    %v52 = vlaneseq
    %v53 = vshrl.u32 %v52, 7
    %v54 = vsub.s32 0, %v53
    %v55 = vrot.slane %v24, %v54
    %v56 = vlaneseq
    %v57 = vshrl.u32 %v56, 7
    %v58 = vsub.s32 0, %v57
    %v59 = vrot.slane %v25, %v58
    %v60 = vlaneseq
    %v61 = vshrl.u32 %v60, 7
    %v62 = vsub.s32 0, %v61
    %v63 = vrot.slane %v26, %v62
    %v64 = vlaneseq
    %v65 = vshrl.u32 %v64, 7
    %v66 = vsub.s32 0, %v65
    %v67 = vrot.slane %v27, %v66
    %v76 = vadd.f32 %v12, %v39
    %v77 = vadd.f32 %v13, %v43
    %v78 = vadd.f32 %v14, %v47
    %v79 = vadd.f32 %v15, %v51
    %v80 = vadd.f32 %v16, %v55
    %v81 = vadd.f32 %v17, %v59
    %v82 = vadd.f32 %v18, %v63
    %v83 = vadd.f32 %v19, %v67
    %vm84 = vcmask 254976
    %85 = vst.msk [vmem:[#allocation2] sm:$0x3] %vm84, %v76
    %86 = vst.msk [vmem:[#allocation2 + $0x2] sm:$0x3] %vm84, %v77
    %87 = vst.msk [vmem:[#allocation2 + $0x4] sm:$0x3] %vm84, %v78
    %88 = vst.msk [vmem:[#allocation2 + $0x6] sm:$0x3] %vm84, %v79
    %89 = vst.msk [vmem:[#allocation2 + $0x8] sm:$0x3] %vm84, %v80
    %90 = vst.msk [vmem:[#allocation2 + $0xa] sm:$0x3] %vm84, %v81
    %91 = vst.msk [vmem:[#allocation2 + $0xc] sm:$0x3] %vm84, %v82
    %92 = vst.msk [vmem:[#allocation2 + $0xe] sm:$0x3] %vm84, %v83
    // Predicated region
    $region10: #{positional_encoding_forward.1} parent=1 // pred_check
      _
    $region11: #{positional_encoding_forward.1} parent=1 // pred_check_branch
      %94 = sbr.rel (0) target = $region13
    $region12: #{positional_encoding_forward.1} parent=1 // pred_region
      %s96 = ssub.s32 256, 256
      %97 = vsyncadd [#allocation3], %s96
      %s98 = sshll.u32 [#allocation2], 4
      %s99 = int_to_ptr.vmem [resolvable:$true] %s98
      %104 = dma.vmem_to_hbm [thread:$0]  %s99, 256, %s2, [#allocation3], 32, 32, 2
    $region13: #{positional_encoding_forward.1} parent=1 // pred_fallthru
      _
    // Predicated region
    $region14: #{positional_encoding_forward.1} parent=1 // pred_check
      _
    $region15: #{positional_encoding_forward.1} parent=1 // pred_check_branch
      %106 = sbr.rel (0) target = $region17
    $region16: #{positional_encoding_forward.1} parent=1 // pred_region
      %107 = dma.done [#allocation3], 256
    $region17: #{positional_encoding_forward.1} parent=1 // pred_fallthru
      _
    %108 = vsyncpa [#allocation3], 1

</llo_original>
